<compile_context>
chip_gen: v7x
topology: tpu7x:2x2x1
jax: 0.10.0
libtpu: 0.0.40
codegen_flags: <defaults>
</compile_context>

<pallas_src>
import functools

import jax
import jax.numpy as jnp
from jax.experimental import pallas as pl
from jax.experimental.pallas import tpu as pltpu


def _round_up(x, m):
    return (x + m - 1) // m * m


def fc_predictor_kernel(x_ref, w1_ref, b1_ref, w2_ref, b2_ref, o_ref):
    # x_ref:  (TM, K)     f32   flattened features for this M-tile (unpadded K)
    # w1_ref: (K, HID)    bf16  fc1 weight, resident (transposed vs. torch)
    # b1_ref: (1, HID)    f32   fc1 bias, resident
    # w2_ref: (HID, NP)   bf16  fc2 weight, resident (N zero-padded to 128)
    # b2_ref: (1, NP)     f32   fc2 bias, resident (zero-padded)
    # o_ref:  (TM, NP)    bf16  lane-dense padded output
    x = x_ref[...].astype(jnp.bfloat16)            # cast on VPU (has slack)
    h = jnp.dot(x, w1_ref[...], preferred_element_type=jnp.float32)
    h = jnp.maximum(h + b1_ref[...], 0.0)          # bias + ReLU in f32
    o = jnp.dot(h.astype(jnp.bfloat16), w2_ref[...],
                preferred_element_type=jnp.float32)
    o_ref[...] = (o + b2_ref[...]).astype(o_ref.dtype)


def make_fc_predictor(w1, b1, w2, b2, *, max_tm=1024, min_pallas_rows=0):
    """Pad/cast the weights once and return a jit-able forward function.

    w1: (K, 256), b1: (256,) or (1, 256), w2: (256, N), b2: (N,) or (1, N)
    (weights stored transposed vs. torch's (out, in) so the kernel uses plain
    row-major MXU matmuls).
    """
    K, hidden = w1.shape
    N = w2.shape[1]
    NP = _round_up(max(N, 128), 128)               # lane-dense output slab

    # Hoisted one-time weight preparation (folded to constants under jit).
    w1b = w1.astype(jnp.bfloat16)                              # (K, HID)
    b1f = jnp.reshape(b1, (1, hidden)).astype(jnp.float32)     # (1, HID)
    w2b = jnp.pad(w2, ((0, 0), (0, NP - N))).astype(jnp.bfloat16)   # (HID, NP)
    b2f = jnp.pad(jnp.reshape(b2, (1, N)),
                  ((0, 0), (0, NP - N))).astype(jnp.float32)         # (1, NP)

    # v7x has 2 TensorCores per chip; CORE_PARALLEL actually shards the M
    # grid across them (plain "parallel" alone does not).  v5e/v6e: single TC.
    try:
        _kind = jax.devices()[0].device_kind.lower()
    except Exception:  # pragma: no cover
        _kind = ""
    is_multi_tc = ("v7" in _kind) or ("7x" in _kind)

    def forward(x):
        BS, T, C, H, W = x.shape
        M = BS * T
        assert C * H * W == K, "input feature size mismatch with fc1"
        x2d = x.reshape(M, K)                      # metadata-only reshape

        if M < min_pallas_rows:
            # Tiny-batch fallback: fixed launch/wrapper overhead dominates.
            h = jnp.maximum(x2d @ w1.astype(jnp.float32) + b1f, 0.0)
            out = h @ w2.astype(jnp.float32) + jnp.reshape(b2, (1, N))
            return {'pred': out.reshape(BS, T, N), 'fpred': None, 'bpred': None}

        # M tiling: single full-dim block for small M, else 1024-row tiles
        # (multiple of 16 for bf16 sublane packing).  Ragged last block is
        # handled by Pallas (OOB rows never reach the real output).
        tm = M if M <= max_tm else max_tm
        grid_m = pl.cdiv(M, tm)

        if is_multi_tc and grid_m >= 2:
            dim_sem = (pltpu.CORE_PARALLEL,)
        else:
            dim_sem = ("parallel",)

        bf16, f32 = 2, 4
        cost = pl.CostEstimate(
            flops=2 * M * (K * hidden + hidden * NP),
            transcendentals=0,
            bytes_accessed=(M * K * f32 + K * hidden * bf16
                            + hidden * NP * bf16 + hidden * f32 + NP * f32
                            + M * NP * bf16),
        )

        out2d = pl.pallas_call(
            fc_predictor_kernel,
            out_shape=jax.ShapeDtypeStruct((M, NP), jnp.bfloat16),
            grid=(grid_m,),
            in_specs=[
                pl.BlockSpec((tm, K), lambda i: (i, 0)),        # x tile (f32, pipelined)
                pl.BlockSpec((K, hidden), lambda i: (0, 0)),    # W1 resident
                pl.BlockSpec((1, hidden), lambda i: (0, 0)),    # b1 resident
                pl.BlockSpec((hidden, NP), lambda i: (0, 0)),   # W2 resident
                pl.BlockSpec((1, NP), lambda i: (0, 0)),        # b2 resident
            ],
            out_specs=pl.BlockSpec((tm, NP), lambda i: (i, 0)),
            compiler_params=pltpu.CompilerParams(
                dimension_semantics=dim_sem,
            ),
            cost_estimate=cost,
        )(x2d, w1b, b1f, w2b, b2f)

        # Only columns [0:N] of the padded slab are meaningful; slice before
        # the reshape so XLA fuses slice + cast + reshape into one small copy.
        pred = out2d[:, :N].astype(jnp.float32).reshape(BS, T, N)
        return {'pred': pred, 'fpred': None, 'bpred': None}

    return forward


if __name__ == "__main__":
    # Shapes implied by the module: fc1 input is 7*7*num_out_feat4 -> H=W=7.
    # batch=2, T=4 frames, num_out_feat4=4 channels, num_points=8 -> 16 outs.
    BS, T, C, H, W = 2, 4, 4, 7, 7
    num_points = 8
    hidden = 256
    K = C * H * W          # 196
    N = num_points * 2     # 16

    key = jax.random.PRNGKey(0)
    kx, kw1, kb1, kw2, kb2 = jax.random.split(key, 5)

    x = jax.random.normal(kx, (BS, T, C, H, W), dtype=jnp.float32)
    # torch Linear weight is (out, in); we store the transpose (in, out).
    w1 = jax.random.normal(kw1, (K, hidden), dtype=jnp.float32) * 0.05
    b1 = jax.random.normal(kb1, (hidden,), dtype=jnp.float32) * 0.05
    w2 = jax.random.normal(kw2, (hidden, N), dtype=jnp.float32) * 0.05
    b2 = jax.random.normal(kb2, (N,), dtype=jnp.float32) * 0.05

    forward = make_fc_predictor(w1, b1, w2, b2)
    fwd = jax.jit(forward)
    out = fwd(x)
    pred = jax.block_until_ready(out['pred'])
    assert pred.shape == (BS, T, N)
    assert out['fpred'] is None and out['bpred'] is None

    # Pure-JAX f32 reference of the same math (kernel uses bf16 MXU operands
    # with f32 accumulation and a bf16 output, so tolerances are loosened).
    x2d = x.reshape(BS * T, K)
    ref = (jnp.maximum(x2d @ w1 + b1[None, :], 0.0) @ w2 + b2[None, :]
           ).reshape(BS, T, N)
    assert jnp.allclose(pred, ref, atol=5e-2, rtol=5e-2), (
        float(jnp.max(jnp.abs(pred - ref))))

    print("KERNEL_OK")
</pallas_src>

<mosaic_0001>
module attributes {stable_mosaic.version = 11 : i64} {
  func.func @fc_predictor_kernel(%arg0: i32, %arg1: memref<8x196xf32, #tpu.memory_space<vmem>>, %arg2: memref<196x256xbf16, #tpu.memory_space<vmem>>, %arg3: memref<1x256xf32, #tpu.memory_space<vmem>>, %arg4: memref<256x128xbf16, #tpu.memory_space<vmem>>, %arg5: memref<1x128xf32, #tpu.memory_space<vmem>>, %arg6: memref<8x128xbf16, #tpu.memory_space<vmem>>) attributes {dimension_semantics = [#tpu.dimension_semantics<parallel>], iteration_bounds = array<i64: 1>, scalar_prefetch = 0 : i64, scratch_operands = 0 : i64, tpu.core_type = #tpu.core_type<tc>, window_params = [{transform_indices = @transform_0, window_bounds = array<i64: 8, 196>}, {pipeline_mode = #tpu.pipeline_mode<synchronous>, transform_indices = @transform_1, window_bounds = array<i64: 196, 256>}, {pipeline_mode = #tpu.pipeline_mode<synchronous>, transform_indices = @transform_2, window_bounds = array<i64: 1, 256>}, {pipeline_mode = #tpu.pipeline_mode<synchronous>, transform_indices = @transform_3, window_bounds = array<i64: 256, 128>}, {pipeline_mode = #tpu.pipeline_mode<synchronous>, transform_indices = @transform_4, window_bounds = array<i64: 1, 128>}, {transform_indices = @transform_5, window_bounds = array<i64: 8, 128>}]} {
    %c0 = arith.constant 0 : index
    %c0_0 = arith.constant 0 : index
    %0 = vector.load %arg1[%c0, %c0_0] : memref<8x196xf32, #tpu.memory_space<vmem>>, vector<8x196xf32>
    %1 = arith.truncf %0 : vector<8x196xf32> to vector<8x196xbf16>
    %c0_1 = arith.constant 0 : index
    %c0_2 = arith.constant 0 : index
    %2 = vector.load %arg2[%c0_1, %c0_2] : memref<196x256xbf16, #tpu.memory_space<vmem>>, vector<196x256xbf16>
    %cst = arith.constant dense<0.000000e+00> : vector<8x256xf32>
    %3 = tpu.matmul %1, %2, %cst {dimension_numbers = #tpu.dot_dimension_numbers<[1], [0], [0], [1], [0, 0, 1, 1], [], []>} : vector<8x196xbf16>, vector<196x256xbf16>, vector<8x256xf32> -> vector<8x256xf32>
    %c0_3 = arith.constant 0 : index
    %c0_4 = arith.constant 0 : index
    %4 = vector.load %arg3[%c0_3, %c0_4] : memref<1x256xf32, #tpu.memory_space<vmem>>, vector<1x256xf32>
    %5 = vector.broadcast %4 : vector<1x256xf32> to vector<8x256xf32>
    %6 = arith.addf %3, %5 : vector<8x256xf32>
    %cst_5 = arith.constant 0.000000e+00 : f32
    %7 = vector.broadcast %cst_5 : f32 to vector<8x256xf32>
    %8 = arith.maximumf %6, %7 : vector<8x256xf32>
    %9 = arith.truncf %8 : vector<8x256xf32> to vector<8x256xbf16>
    %c0_6 = arith.constant 0 : index
    %c0_7 = arith.constant 0 : index
    %10 = vector.load %arg4[%c0_6, %c0_7] : memref<256x128xbf16, #tpu.memory_space<vmem>>, vector<256x128xbf16>
    %cst_8 = arith.constant dense<0.000000e+00> : vector<8x128xf32>
    %11 = tpu.matmul %9, %10, %cst_8 {dimension_numbers = #tpu.dot_dimension_numbers<[1], [0], [0], [1], [0, 0, 1, 1], [], []>} : vector<8x256xbf16>, vector<256x128xbf16>, vector<8x128xf32> -> vector<8x128xf32>
    %c0_9 = arith.constant 0 : index
    %c0_10 = arith.constant 0 : index
    %12 = vector.load %arg5[%c0_9, %c0_10] : memref<1x128xf32, #tpu.memory_space<vmem>>, vector<1x128xf32>
    %13 = vector.broadcast %12 : vector<1x128xf32> to vector<8x128xf32>
    %14 = arith.addf %11, %13 : vector<8x128xf32>
    %15 = arith.truncf %14 : vector<8x128xf32> to vector<8x128xbf16>
    %c0_11 = arith.constant 0 : index
    %c0_12 = arith.constant 0 : index
    %16 = vector.load %arg6[%c0_11, %c0_12] : memref<8x128xbf16, #tpu.memory_space<vmem>>, vector<8x128xbf16>
    tpu.vector_store %arg6[%c0_11, %c0_12], %15 {strides = array<i32>} : memref<8x128xbf16, #tpu.memory_space<vmem>>, vector<8x128xbf16>,
    return
  }
  func.func @transform_0(%arg0: i32) -> (i32, i32) {
    %c0_i32 = arith.constant 0 : i32
    %c0_i32_0 = arith.constant 0 : i32
    return %arg0, %c0_i32 : i32, i32
  }
  func.func @transform_1(%arg0: i32) -> (i32, i32) {
    %c0_i32 = arith.constant 0 : i32
    %c0_i32_0 = arith.constant 0 : i32
    %c0_i32_1 = arith.constant 0 : i32
    return %c0_i32, %c0_i32_0 : i32, i32
  }
  func.func @transform_2(%arg0: i32) -> (i32, i32) {
    %c0_i32 = arith.constant 0 : i32
    %c0_i32_0 = arith.constant 0 : i32
    %c0_i32_1 = arith.constant 0 : i32
    return %c0_i32, %c0_i32_0 : i32, i32
  }
  func.func @transform_3(%arg0: i32) -> (i32, i32) {
    %c0_i32 = arith.constant 0 : i32
    %c0_i32_0 = arith.constant 0 : i32
    %c0_i32_1 = arith.constant 0 : i32
    return %c0_i32, %c0_i32_0 : i32, i32
  }
  func.func @transform_4(%arg0: i32) -> (i32, i32) {
    %c0_i32 = arith.constant 0 : i32
    %c0_i32_0 = arith.constant 0 : i32
    %c0_i32_1 = arith.constant 0 : i32
    return %c0_i32, %c0_i32_0 : i32, i32
  }
  func.func @transform_5(%arg0: i32) -> (i32, i32) {
    %c0_i32 = arith.constant 0 : i32
    %c0_i32_0 = arith.constant 0 : i32
    return %arg0, %c0_i32 : i32, i32
  }
}

</mosaic_0001>

<llo_original>
// kernel: forward.1
$region0: #{forward.1}
  #allocation0 [shape = 'u32[]', space=smem, size = 0x4, offset = 0x4, fixed_abs, tag = 'smem constant byte address 0x4 - core index']
  #allocation1 [shape = 'u32[144,128]{1,0:T(1,128)}', space=vmem, size = 0x12000, scoped, tag = 'internal scratch']
  %s0 = inlined_call_operand.vmem [shape: f32[8,196], index: 0, kind: input, shape index: {}]
  %s1 = inlined_call_operand.vmem [shape: bf16[196,256], index: 1, kind: input, shape index: {}]
  %s2 = inlined_call_operand.vmem [shape: f32[1,256], index: 2, kind: input, shape index: {}]
  %s3 = inlined_call_operand.vmem [shape: bf16[256,128], index: 3, kind: input, shape index: {}]
  %s4 = inlined_call_operand.vmem [shape: f32[1,128], index: 4, kind: input, shape index: {}]
  %s5 = inlined_call_operand.vmem [shape: bf16[8,128], index: 5, kind: output, shape index: {}]
  %s6 = sld [smem:[#allocation0]]
  $region30: #{forward.1} parent=0
    _
  %s8 = ssub.s32 1, %s6
  %s9 = scalar_select 0, %s8, %s6
  // Predicated region
  $region2: #{forward.1} parent=0 // pred_check
    _
  $region3: #{forward.1} parent=0 // pred_check_branch
    %11 = sbr.rel (0) target = $region5
  $region4: #{forward.1} parent=0 // pred_region
    _
  $region5: #{forward.1} parent=0 // pred_fallthru
    _
  // Predicated region
  $region6: #{forward.1} parent=0 // pred_check
    _
  $region7: #{forward.1} parent=0 // pred_check_branch
    %13 = sbr.rel (0) target = $region9
  $region8: #{forward.1} parent=0 // pred_region
    _
  $region9: #{forward.1} parent=0 // pred_fallthru
    _
  // Predicated region
  $region10: #{forward.1} parent=0 // pred_check
    _
  $region11: #{forward.1} parent=0 // pred_check_branch
    %15 = sbr.rel (0) target = $region13
  $region12: #{forward.1} parent=0 // pred_region
    _
  $region13: #{forward.1} parent=0 // pred_fallthru
    _
  // Predicated region
  $region14: #{forward.1} parent=0 // pred_check
    _
  $region15: #{forward.1} parent=0 // pred_check_branch
    %17 = sbr.rel (0) target = $region17
  $region16: #{forward.1} parent=0 // pred_region
    _
  $region17: #{forward.1} parent=0 // pred_fallthru
    _
  // Predicated region
  $region18: #{forward.1} parent=0 // pred_check
    _
  $region19: #{forward.1} parent=0 // pred_check_branch
    %19 = sbr.rel (0) target = $region21
  $region20: #{forward.1} parent=0 // pred_region
    _
  $region21: #{forward.1} parent=0 // pred_fallthru
    _
  %v21 = vld [vmem:[%s0] sm:$0xff]
  %v22 = vld [vmem:[%s0 + $0x8] sm:$0xff]
  %v23 = vpack.c.bf16 %v21, %v21
  %v24 = vpack.c.bf16 %v22, %v22
  %v25 = vld [vmem:[%s1] sm:$0xff]
  %v26 = vld [vmem:[%s1 + $0x8] sm:$0xff]
  %v27 = vld [vmem:[%s1 + $0x10] sm:$0xff]
  %v28 = vld [vmem:[%s1 + $0x18] sm:$0xff]
  %v29 = vld [vmem:[%s1 + $0x20] sm:$0xff]
  %v30 = vld [vmem:[%s1 + $0x28] sm:$0xff]
  %v31 = vld [vmem:[%s1 + $0x30] sm:$0xff]
  %v32 = vld [vmem:[%s1 + $0x38] sm:$0xff]
  %v33 = vld [vmem:[%s1 + $0x40] sm:$0xff]
  %v34 = vld [vmem:[%s1 + $0x48] sm:$0xff]
  %v35 = vld [vmem:[%s1 + $0x50] sm:$0xff]
  %v36 = vld [vmem:[%s1 + $0x58] sm:$0xff]
  %v37 = vld [vmem:[%s1 + $0x60] sm:$0xff]
  %v38 = vld [vmem:[%s1 + $0x68] sm:$0xff]
  %v39 = vld [vmem:[%s1 + $0x70] sm:$0xff]
  %v40 = vld [vmem:[%s1 + $0x78] sm:$0xff]
  %v41 = vld [vmem:[%s1 + $0x80] sm:$0xff]
  %v42 = vld [vmem:[%s1 + $0x88] sm:$0xff]
  %v43 = vld [vmem:[%s1 + $0x90] sm:$0xff]
  %v44 = vld [vmem:[%s1 + $0x98] sm:$0xff]
  %v45 = vld [vmem:[%s1 + $0xa0] sm:$0xff]
  %v46 = vld [vmem:[%s1 + $0xa8] sm:$0xff]
  %v47 = vld [vmem:[%s1 + $0xb0] sm:$0xff]
  %v48 = vld [vmem:[%s1 + $0xb8] sm:$0xff]
  %v49 = vld [vmem:[%s1 + $0xc0] sm:$0x33]
  %v50 = vld [vmem:[%s2] sm:$0x3]
  %v52 = vlaneseq
  %v53 = vshrl.u32 %v52, 7
  %v54 = vsub.s32 0, %v53
  %v55 = vrot.slane %v50, %v54
  %v56 = vlaneseq
  %v57 = vshrl.u32 %v56, 7
  %v58 = vsub.s32 1, %v57
  %v59 = vrot.slane %v50, %v58
  %v87 = vunpack.c.l.b16 %v25
  %v88 = vunpack.c.h.b16 %v25
  %v89 = vunpack.c.l.b16 %v26
  %v90 = vunpack.c.h.b16 %v26
  %v91 = vunpack.c.l.b16 %v27
  %v92 = vunpack.c.h.b16 %v27
  %v93 = vunpack.c.l.b16 %v28
  %v94 = vunpack.c.h.b16 %v28
  %v95 = vunpack.c.l.b16 %v29
  %v96 = vunpack.c.h.b16 %v29
  %v97 = vunpack.c.l.b16 %v30
  %v98 = vunpack.c.h.b16 %v30
  %v99 = vunpack.c.l.b16 %v31
  %v100 = vunpack.c.h.b16 %v31
  %v101 = vunpack.c.l.b16 %v32
  %v102 = vunpack.c.h.b16 %v32
  %v103 = vunpack.c.l.b16 %v33
  %v104 = vunpack.c.h.b16 %v33
  %v105 = vunpack.c.l.b16 %v34
  %v106 = vunpack.c.h.b16 %v34
  %v107 = vunpack.c.l.b16 %v35
  %v108 = vunpack.c.h.b16 %v35
  %v109 = vunpack.c.l.b16 %v36
  %v110 = vunpack.c.h.b16 %v36
  %v111 = vunpack.c.l.b16 %v37
  %v112 = vunpack.c.h.b16 %v37
  %v113 = vunpack.c.l.b16 %v38
  %v114 = vunpack.c.h.b16 %v38
  %v115 = vunpack.c.l.b16 %v39
  %v116 = vunpack.c.h.b16 %v39
  %v117 = vunpack.c.l.b16 %v40
  %v118 = vunpack.c.h.b16 %v40
  %v119 = vunpack.c.l.b16 %v41
  %v120 = vunpack.c.h.b16 %v41
  %v121 = vunpack.c.l.b16 %v42
  %v122 = vunpack.c.h.b16 %v42
  %v123 = vunpack.c.l.b16 %v43
  %v124 = vunpack.c.h.b16 %v43
  %v125 = vunpack.c.l.b16 %v44
  %v126 = vunpack.c.h.b16 %v44
  %v127 = vunpack.c.l.b16 %v45
  %v128 = vunpack.c.h.b16 %v45
  %v129 = vunpack.c.l.b16 %v46
  %v130 = vunpack.c.h.b16 %v46
  %v131 = vunpack.c.l.b16 %v47
  %v132 = vunpack.c.h.b16 %v47
  %v133 = vunpack.c.l.b16 %v48
  %v134 = vunpack.c.h.b16 %v48
  %v135 = vunpack.c.l.b16 %v49
  %v136 = vunpack.c.h.b16 %v49
  %v137 = vpack.c.b16 %v89, %v87
  %v138 = vpack.c.b16 %v90, %v88
  %v139 = vpack.c.b16 %v93, %v91
  %v140 = vpack.c.b16 %v94, %v92
  %v141 = vpack.c.b16 %v97, %v95
  %v142 = vpack.c.b16 %v98, %v96
  %v143 = vpack.c.b16 %v101, %v99
  %v144 = vpack.c.b16 %v102, %v100
  %v145 = vpack.c.b16 %v105, %v103
  %v146 = vpack.c.b16 %v106, %v104
  %v147 = vpack.c.b16 %v109, %v107
  %v148 = vpack.c.b16 %v110, %v108
  %v149 = vpack.c.b16 %v113, %v111
  %v150 = vpack.c.b16 %v114, %v112
  %v151 = vpack.c.b16 %v117, %v115
  %v152 = vpack.c.b16 %v118, %v116
  %v153 = vpack.c.b16 %v121, %v119
  %v154 = vpack.c.b16 %v122, %v120
  %v155 = vpack.c.b16 %v125, %v123
  %v156 = vpack.c.b16 %v126, %v124
  %v157 = vpack.c.b16 %v129, %v127
  %v158 = vpack.c.b16 %v130, %v128
  %v159 = vpack.c.b16 %v133, %v131
  %v160 = vpack.c.b16 %v134, %v132
  %v161 = vpack.c.b16 %v135, %v135
  %v162 = vpack.c.b16 %v136, %v136
  %vm187 = vcmask 556032
  %v189 = vsel %vm187, %v24, 0
  %vm191 = vcmask 1041408
  %v193 = vsel %vm191, %v161, 0
  %v196 = vsel %vm191, %v162, 0
  %198 = vmatprep.subr.bf16.mxu0 %v138
  %199 = vmatpush1.bf16.msra.mxu0 %v137
  %200 = vmatprep.subr.bf16.mxu0 %v140
  %201 = vmatpush1.bf16.msra.mxu0 %v139
  %202 = vmatprep.subr.bf16.mxu0 %v142
  %203 = vmatpush1.bf16.msra.mxu0 %v141
  %204 = vmatprep.subr.bf16.mxu0 %v144
  %205 = vmatpush1.bf16.msra.mxu0 %v143
  %206 = vmatprep.subr.bf16.mxu0 %v146
  %207 = vmatpush1.bf16.msra.mxu0 %v145
  %208 = vmatprep.subr.bf16.mxu0 %v148
  %209 = vmatpush1.bf16.msra.mxu0 %v147
  %210 = vmatprep.subr.bf16.mxu0 %v150
  %211 = vmatpush1.bf16.msra.mxu0 %v149
  %212 = vmatprep.subr.bf16.mxu0 %v152
  %213 = vmatpush1.bf16.msra.mxu0 %v151
  %214 = vmatprep.subr.bf16.mxu0 %v154
  %215 = vmatpush1.bf16.msra.mxu0 %v153
  %216 = vmatprep.subr.bf16.mxu0 %v156
  %217 = vmatpush1.bf16.msra.mxu0 %v155
  %218 = vmatprep.subr.bf16.mxu0 %v158
  %219 = vmatpush1.bf16.msra.mxu0 %v157
  %220 = vmatprep.subr.bf16.mxu0 %v160
  %221 = vmatpush1.bf16.msra.mxu0 %v159
  %222 = vmatprep.subr.bf16.mxu0 %v196
  %223 = vmatpush1.bf16.msra.mxu0 %v193
  %224 = vmatprep.subr.bf16.mxu0 0
  %225 = vmatpush1.bf16.msra.mxu0 0
  %226 = vmatprep.subr.bf16.mxu0 0
  %227 = vmatpush1.bf16.msra.mxu0 0
  %228 = vmatprep.subr.bf16.mxu0 0
  %229 = vmatpush1.bf16.msra.mxu0 0
  %230 = vmatprep.mubr.bf16.mxu0 %v189
  %231 = vmatmul.mubr.bf16.gmra.mrb[0].mxu0 %v23
  %v232 = vpop.f32.mrb[0].mxu0
  %v233 = vadd.f32 %v55, %v232
  %v234 = vpop.f32.mrb[0].mxu0
  %v235 = vadd.f32 %v59, %v234
  %v236 = vpop.f32.mrb[0].mxu0
  %v237 = vpop.f32.mrb[0].mxu0
  %238 = vdwg.mxu0
  %v239 = vmax.f32 %v233, 0.0
  %v240 = vmax.f32 %v235, 0.0
  %v241 = vpack.c.bf16 %v239, %v239
  %v242 = vpack.c.bf16 %v240, %v240
  %v243 = vld [vmem:[%s3] sm:$0xf]
  %v244 = vld [vmem:[%s3 + $0x4] sm:$0xf]
  %v245 = vld [vmem:[%s3 + $0x8] sm:$0xf]
  %v246 = vld [vmem:[%s3 + $0xc] sm:$0xf]
  %v247 = vld [vmem:[%s3 + $0x10] sm:$0xf]
  %v248 = vld [vmem:[%s3 + $0x14] sm:$0xf]
  %v249 = vld [vmem:[%s3 + $0x18] sm:$0xf]
  %v250 = vld [vmem:[%s3 + $0x1c] sm:$0xf]
  %v251 = vld [vmem:[%s3 + $0x20] sm:$0xf]
  %v252 = vld [vmem:[%s3 + $0x24] sm:$0xf]
  %v253 = vld [vmem:[%s3 + $0x28] sm:$0xf]
  %v254 = vld [vmem:[%s3 + $0x2c] sm:$0xf]
  %v255 = vld [vmem:[%s3 + $0x30] sm:$0xf]
  %v256 = vld [vmem:[%s3 + $0x34] sm:$0xf]
  %v257 = vld [vmem:[%s3 + $0x38] sm:$0xf]
  %v258 = vld [vmem:[%s3 + $0x3c] sm:$0xf]
  %v259 = vld [vmem:[%s3 + $0x40] sm:$0xf]
  %v260 = vld [vmem:[%s3 + $0x44] sm:$0xf]
  %v261 = vld [vmem:[%s3 + $0x48] sm:$0xf]
  %v262 = vld [vmem:[%s3 + $0x4c] sm:$0xf]
  %v263 = vld [vmem:[%s3 + $0x50] sm:$0xf]
  %v264 = vld [vmem:[%s3 + $0x54] sm:$0xf]
  %v265 = vld [vmem:[%s3 + $0x58] sm:$0xf]
  %v266 = vld [vmem:[%s3 + $0x5c] sm:$0xf]
  %v267 = vld [vmem:[%s3 + $0x60] sm:$0xf]
  %v268 = vld [vmem:[%s3 + $0x64] sm:$0xf]
  %v269 = vld [vmem:[%s3 + $0x68] sm:$0xf]
  %v270 = vld [vmem:[%s3 + $0x6c] sm:$0xf]
  %v271 = vld [vmem:[%s3 + $0x70] sm:$0xf]
  %v272 = vld [vmem:[%s3 + $0x74] sm:$0xf]
  %v273 = vld [vmem:[%s3 + $0x78] sm:$0xf]
  %v274 = vld [vmem:[%s3 + $0x7c] sm:$0xf]
  %v275 = vld [vmem:[%s4] sm:$0x1]
  %v277 = vlaneseq
  %v278 = vshrl.u32 %v277, 7
  %v279 = vsub.s32 0, %v278
  %v280 = vrot.slane %v275, %v279
  %v314 = vunpack.c.l.b16 %v243
  %v315 = vunpack.c.l.b16 %v244
  %v316 = vunpack.c.l.b16 %v245
  %v317 = vunpack.c.l.b16 %v246
  %v318 = vunpack.c.l.b16 %v247
  %v319 = vunpack.c.l.b16 %v248
  %v320 = vunpack.c.l.b16 %v249
  %v321 = vunpack.c.l.b16 %v250
  %v322 = vunpack.c.l.b16 %v251
  %v323 = vunpack.c.l.b16 %v252
  %v324 = vunpack.c.l.b16 %v253
  %v325 = vunpack.c.l.b16 %v254
  %v326 = vunpack.c.l.b16 %v255
  %v327 = vunpack.c.l.b16 %v256
  %v328 = vunpack.c.l.b16 %v257
  %v329 = vunpack.c.l.b16 %v258
  %v330 = vunpack.c.l.b16 %v259
  %v331 = vunpack.c.l.b16 %v260
  %v332 = vunpack.c.l.b16 %v261
  %v333 = vunpack.c.l.b16 %v262
  %v334 = vunpack.c.l.b16 %v263
  %v335 = vunpack.c.l.b16 %v264
  %v336 = vunpack.c.l.b16 %v265
  %v337 = vunpack.c.l.b16 %v266
  %v338 = vunpack.c.l.b16 %v267
  %v339 = vunpack.c.l.b16 %v268
  %v340 = vunpack.c.l.b16 %v269
  %v341 = vunpack.c.l.b16 %v270
  %v342 = vunpack.c.l.b16 %v271
  %v343 = vunpack.c.l.b16 %v272
  %v344 = vunpack.c.l.b16 %v273
  %v345 = vunpack.c.l.b16 %v274
  %v346 = vpack.c.b16 %v315, %v314
  %v347 = vpack.c.b16 %v317, %v316
  %v348 = vpack.c.b16 %v319, %v318
  %v349 = vpack.c.b16 %v321, %v320
  %v350 = vpack.c.b16 %v323, %v322
  %v351 = vpack.c.b16 %v325, %v324
  %v352 = vpack.c.b16 %v327, %v326
  %v353 = vpack.c.b16 %v329, %v328
  %v354 = vpack.c.b16 %v331, %v330
  %v355 = vpack.c.b16 %v333, %v332
  %v356 = vpack.c.b16 %v335, %v334
  %v357 = vpack.c.b16 %v337, %v336
  %v358 = vpack.c.b16 %v339, %v338
  %v359 = vpack.c.b16 %v341, %v340
  %v360 = vpack.c.b16 %v343, %v342
  %v361 = vpack.c.b16 %v345, %v344
  %378 = vmatprep.subr.bf16.mxu0 0
  %379 = vmatpush1.bf16.msra.mxu0 %v346
  %380 = vmatprep.subr.bf16.mxu0 0
  %381 = vmatpush1.bf16.msra.mxu0 %v347
  %382 = vmatprep.subr.bf16.mxu0 0
  %383 = vmatpush1.bf16.msra.mxu0 %v348
  %384 = vmatprep.subr.bf16.mxu0 0
  %385 = vmatpush1.bf16.msra.mxu0 %v349
  %386 = vmatprep.subr.bf16.mxu0 0
  %387 = vmatpush1.bf16.msra.mxu0 %v350
  %388 = vmatprep.subr.bf16.mxu0 0
  %389 = vmatpush1.bf16.msra.mxu0 %v351
  %390 = vmatprep.subr.bf16.mxu0 0
  %391 = vmatpush1.bf16.msra.mxu0 %v352
  %392 = vmatprep.subr.bf16.mxu0 0
  %393 = vmatpush1.bf16.msra.mxu0 %v353
  %394 = vmatprep.subr.bf16.mxu0 0
  %395 = vmatpush1.bf16.msra.mxu0 %v354
  %396 = vmatprep.subr.bf16.mxu0 0
  %397 = vmatpush1.bf16.msra.mxu0 %v355
  %398 = vmatprep.subr.bf16.mxu0 0
  %399 = vmatpush1.bf16.msra.mxu0 %v356
  %400 = vmatprep.subr.bf16.mxu0 0
  %401 = vmatpush1.bf16.msra.mxu0 %v357
  %402 = vmatprep.subr.bf16.mxu0 0
  %403 = vmatpush1.bf16.msra.mxu0 %v358
  %404 = vmatprep.subr.bf16.mxu0 0
  %405 = vmatpush1.bf16.msra.mxu0 %v359
  %406 = vmatprep.subr.bf16.mxu0 0
  %407 = vmatpush1.bf16.msra.mxu0 %v360
  %408 = vmatprep.subr.bf16.mxu0 0
  %409 = vmatpush1.bf16.msra.mxu0 %v361
  %410 = vmatprep.mubr.bf16.mxu0 %v242
  %411 = vmatmul.mubr.bf16.gmra.mrb[0].mxu0 %v241
  %v412 = vpop.f32.mrb[0].mxu0
  %v413 = vadd.f32 %v280, %v412
  %v414 = vpop.f32.mrb[0].mxu0
  %v415 = vpop.f32.mrb[0].mxu0
  %v416 = vpop.f32.mrb[0].mxu0
  %417 = vdwg.mxu0
  %v418 = vpack.c.bf16 %v413, %v413
  %419 = vst [vmem:[%s5] sm:$0xf] %v418
  // Predicated region
  $region22: #{forward.1} parent=0 // pred_check
    _
  $region23: #{forward.1} parent=0 // pred_check_branch
    %421 = sbr.rel (0) target = $region25
  $region24: #{forward.1} parent=0 // pred_region
    _
  $region25: #{forward.1} parent=0 // pred_fallthru
    _
  // Predicated region
  $region26: #{forward.1} parent=0 // pred_check
    _
  $region27: #{forward.1} parent=0 // pred_check_branch
    %423 = sbr.rel (0) target = $region29
  $region28: #{forward.1} parent=0 // pred_region
    _
  $region29: #{forward.1} parent=0 // pred_fallthru
    _

</llo_original>
